<compile_context>
chip_gen: v6e
topology: v6e:2x2x1
jax: 0.10.0
libtpu: 0.0.40
codegen_flags: <defaults>
</compile_context>

<pallas_src>
import functools

import jax
import jax.numpy as jnp
from jax.experimental import pallas as pl
from jax.experimental.pallas import tpu as pltpu

EPS = 1e-5


def bn_relu_conv1x1_kernel(x_ref, gb_ref, w_ref, o_ref, mean_ref, var_ref, *,
                           p_true):
    # x_ref   : (Cin, P)   f32
    # gb_ref  : (Cin, 2)   packed [gamma, beta]
    # w_ref   : (Cout, Cin) 1x1 conv weight
    # o_ref   : (Cout, P)  f32
    # mean_ref: (Cin, 1)   batch mean  (extra output)
    # var_ref : (Cin, 1)   batch var   (extra output, biased)
    x = x_ref[...]
    inv_p = jnp.float32(1.0 / p_true)

    # --- BatchNorm2d statistics (training mode, biased variance) ----------
    # Single pass over x: the two lane-reductions are independent and overlap.
    s = jnp.sum(x, axis=-1, keepdims=True)                  # (Cin, 1)
    sq = jnp.sum(x * x, axis=-1, keepdims=True)             # (Cin, 1)
    mean = s * inv_p
    var = jnp.maximum(sq * inv_p - mean * mean, 0.0)        # clamp cancellation

    # --- fold BN affine into a single per-channel scale / shift -----------
    gb = gb_ref[...]
    gamma = gb[:, 0:1]
    beta = gb[:, 1:2]
    scale = gamma * jax.lax.rsqrt(var + EPS)                 # (Cin, 1)
    shift = beta - mean * scale                              # (Cin, 1)

    # --- normalize + ReLU --------------------------------------------------
    y = jnp.maximum(x * scale + shift, 0.0)                  # (Cin, P)

    # --- 1x1 conv == (Cout, Cin) @ (Cin, P) on the MXU, f32 accumulation ---
    o_ref[...] = jnp.dot(w_ref[...], y, preferred_element_type=jnp.float32)
    mean_ref[...] = mean
    var_ref[...] = var


def bn_relu_conv1x1(x_nchw, gamma, beta, conv_w):
    """x_nchw: (N, Cin, H, W); conv_w: (Cout, Cin, 1, 1) -> (N, Cout, H, W)."""
    N, Cin, H, W = x_nchw.shape
    Cout = conv_w.shape[0]
    P = N * H * W

    # NCHW -> (Cin, P). Metadata-only for N == 1.
    # TODO(synk): for N > 1 this moveaxis is a real HBM transpose.
    x_cp = jnp.moveaxis(x_nchw, 1, 0).reshape(Cin, P)
    w_mat = conv_w.reshape(Cout, Cin)
    gb = jnp.stack([gamma, beta], axis=1)                    # (Cin, 2)

    cost = pl.CostEstimate(
        flops=2 * Cout * Cin * P + 6 * Cin * P,
        transcendentals=Cin,
        bytes_accessed=4 * (Cin * P + 2 * Cin + Cout * Cin + Cout * P + 2 * Cin),
    )

    out_mat, batch_mean, batch_var = pl.pallas_call(
        functools.partial(bn_relu_conv1x1_kernel, p_true=P),
        out_shape=(
            jax.ShapeDtypeStruct((Cout, P), jnp.float32),
            jax.ShapeDtypeStruct((Cin, 1), jnp.float32),
            jax.ShapeDtypeStruct((Cin, 1), jnp.float32),
        ),
        grid=(1,),
        in_specs=[
            pl.BlockSpec((Cin, P), lambda i: (0, 0)),        # full-array block
            pl.BlockSpec((Cin, 2), lambda i: (0, 0)),
            pl.BlockSpec((Cout, Cin), lambda i: (0, 0)),
        ],
        out_specs=(
            pl.BlockSpec((Cout, P), lambda i: (0, 0)),       # full-array block
            pl.BlockSpec((Cin, 1), lambda i: (0, 0)),
            pl.BlockSpec((Cin, 1), lambda i: (0, 0)),
        ),
        compiler_params=pltpu.CompilerParams(
            dimension_semantics=("arbitrary",),
        ),
        cost_estimate=cost,
    )(x_cp, gb, w_mat)

    del batch_mean, batch_var  # available for running-stats update if needed

    # (Cout, P) -> (N, Cout, H, W). Metadata-only for N == 1.
    out = out_mat.reshape(Cout, N, H, W)
    return jnp.moveaxis(out, 0, 1)


def reference(x_nchw, gamma, beta, conv_w):
    """Pure-JAX f32 reference of BatchNorm2d(train) + ReLU + 1x1 Conv2d."""
    mean = jnp.mean(x_nchw, axis=(0, 2, 3), keepdims=True)
    var = jnp.mean((x_nchw - mean) ** 2, axis=(0, 2, 3), keepdims=True)
    y = (x_nchw - mean) * jax.lax.rsqrt(var + EPS)
    y = y * gamma[None, :, None, None] + beta[None, :, None, None]
    y = jnp.maximum(y, 0.0)
    return jnp.einsum("nchw,oc->nohw", y, conv_w.reshape(conv_w.shape[0], -1))


if __name__ == "__main__":
    # Shapes from the PyTorch module: x81 = (1, 240, 14, 14), Conv2d(240 -> 40, 1x1)
    N, Cin, H, W = 1, 240, 14, 14
    Cout = 40

    key = jax.random.PRNGKey(0)
    kx, kg, kb, kw = jax.random.split(key, 4)
    x = jax.random.normal(kx, (N, Cin, H, W), dtype=jnp.float32)
    gamma = 1.0 + 0.1 * jax.random.normal(kg, (Cin,), dtype=jnp.float32)
    beta = 0.1 * jax.random.normal(kb, (Cin,), dtype=jnp.float32)
    conv_w = 0.05 * jax.random.normal(kw, (Cout, Cin, 1, 1), dtype=jnp.float32)

    out = jax.block_until_ready(bn_relu_conv1x1(x, gamma, beta, conv_w))
    ref = jax.block_until_ready(reference(x, gamma, beta, conv_w))

    assert out.shape == (N, Cout, H, W), out.shape
    # Conservative tolerance; with f32 MXU operands the observed error is
    # typically << 1e-3 at these magnitudes.
    assert jnp.allclose(out, ref, atol=2e-2, rtol=2e-2), float(
        jnp.max(jnp.abs(out - ref)))
    print("KERNEL_OK")
</pallas_src>

<mosaic_0001>
module attributes {stable_mosaic.version = 11 : i64} {
  func.func @bn_relu_conv1x1_kernel(%arg0: i32, %arg1: memref<240x196xf32, #tpu.memory_space<vmem>>, %arg2: memref<240x2xf32, #tpu.memory_space<vmem>>, %arg3: memref<40x240xf32, #tpu.memory_space<vmem>>, %arg4: memref<40x196xf32, #tpu.memory_space<vmem>>, %arg5: memref<240x1xf32, #tpu.memory_space<vmem>>, %arg6: memref<240x1xf32, #tpu.memory_space<vmem>>) attributes {dimension_semantics = [#tpu.dimension_semantics<arbitrary>], iteration_bounds = array<i64: 1>, scalar_prefetch = 0 : i64, scratch_operands = 0 : i64, tpu.core_type = #tpu.core_type<tc>, window_params = [{pipeline_mode = #tpu.pipeline_mode<synchronous>, transform_indices = @transform_0, window_bounds = array<i64: 240, 196>}, {pipeline_mode = #tpu.pipeline_mode<synchronous>, transform_indices = @transform_1, window_bounds = array<i64: 240, 2>}, {pipeline_mode = #tpu.pipeline_mode<synchronous>, transform_indices = @transform_2, window_bounds = array<i64: 40, 240>}, {pipeline_mode = #tpu.pipeline_mode<synchronous>, transform_indices = @transform_3, window_bounds = array<i64: 40, 196>}, {pipeline_mode = #tpu.pipeline_mode<synchronous>, transform_indices = @transform_4, window_bounds = array<i64: 240, 1>}, {pipeline_mode = #tpu.pipeline_mode<synchronous>, transform_indices = @transform_5, window_bounds = array<i64: 240, 1>}]} {
    %c0 = arith.constant 0 : index
    %c0_0 = arith.constant 0 : index
    %0 = vector.load %arg1[%c0, %c0_0] : memref<240x196xf32, #tpu.memory_space<vmem>>, vector<240x196xf32>
    %cst = arith.constant dense<0.000000e+00> : vector<240xf32>
    %1 = vector.multi_reduction <add>, %0, %cst [1] : vector<240x196xf32> to vector<240xf32>
    %2 = vector.shape_cast %1 : vector<240xf32> to vector<240x1xf32>
    %3 = arith.mulf %0, %0 : vector<240x196xf32>
    %cst_1 = arith.constant dense<0.000000e+00> : vector<240xf32>
    %4 = vector.multi_reduction <add>, %3, %cst_1 [1] : vector<240x196xf32> to vector<240xf32>
    %5 = vector.shape_cast %4 : vector<240xf32> to vector<240x1xf32>
    %cst_2 = arith.constant 0.00510204071 : f32
    %6 = vector.broadcast %cst_2 : f32 to vector<240x1xf32>
    %7 = arith.mulf %2, %6 : vector<240x1xf32>
    %cst_3 = arith.constant 0.00510204071 : f32
    %8 = vector.broadcast %cst_3 : f32 to vector<240x1xf32>
    %9 = arith.mulf %5, %8 : vector<240x1xf32>
    %10 = arith.mulf %7, %7 : vector<240x1xf32>
    %11 = arith.subf %9, %10 : vector<240x1xf32>
    %cst_4 = arith.constant 0.000000e+00 : f32
    %12 = vector.broadcast %cst_4 : f32 to vector<240x1xf32>
    %13 = arith.maximumf %11, %12 : vector<240x1xf32>
    %c0_5 = arith.constant 0 : index
    %c0_6 = arith.constant 0 : index
    %14 = vector.load %arg2[%c0_5, %c0_6] : memref<240x2xf32, #tpu.memory_space<vmem>>, vector<240x2xf32>
    %15 = vector.extract_strided_slice %14 {offsets = [0, 0], sizes = [240, 1], strides = [1, 1]} : vector<240x2xf32> to vector<240x1xf32>
    %16 = vector.extract_strided_slice %14 {offsets = [0, 1], sizes = [240, 1], strides = [1, 1]} : vector<240x2xf32> to vector<240x1xf32>
    %cst_7 = arith.constant 9.99999974E-6 : f32
    %17 = vector.broadcast %cst_7 : f32 to vector<240x1xf32>
    %18 = arith.addf %13, %17 : vector<240x1xf32>
    %19 = math.rsqrt %18 : vector<240x1xf32>
    %20 = arith.mulf %15, %19 : vector<240x1xf32>
    %21 = arith.mulf %7, %20 : vector<240x1xf32>
    %22 = arith.subf %16, %21 : vector<240x1xf32>
    %23 = vector.broadcast %20 : vector<240x1xf32> to vector<240x196xf32>
    %24 = arith.mulf %0, %23 : vector<240x196xf32>
    %25 = vector.broadcast %22 : vector<240x1xf32> to vector<240x196xf32>
    %26 = arith.addf %24, %25 : vector<240x196xf32>
    %cst_8 = arith.constant 0.000000e+00 : f32
    %27 = vector.broadcast %cst_8 : f32 to vector<240x196xf32>
    %28 = arith.maximumf %26, %27 : vector<240x196xf32>
    %c0_9 = arith.constant 0 : index
    %c0_10 = arith.constant 0 : index
    %29 = vector.load %arg3[%c0_9, %c0_10] : memref<40x240xf32, #tpu.memory_space<vmem>>, vector<40x240xf32>
    %cst_11 = arith.constant dense<0.000000e+00> : vector<40x196xf32>
    %30 = tpu.matmul %29, %28, %cst_11 {dimension_numbers = #tpu.dot_dimension_numbers<[1], [0], [0], [1], [0, 0, 1, 1], [], []>} : vector<40x240xf32>, vector<240x196xf32>, vector<40x196xf32> -> vector<40x196xf32>
    %c0_12 = arith.constant 0 : index
    %c0_13 = arith.constant 0 : index
    %31 = vector.load %arg4[%c0_12, %c0_13] : memref<40x196xf32, #tpu.memory_space<vmem>>, vector<40x196xf32>
    tpu.vector_store %arg4[%c0_12, %c0_13], %30 {strides = array<i32>} : memref<40x196xf32, #tpu.memory_space<vmem>>, vector<40x196xf32>,
    %c0_14 = arith.constant 0 : index
    %c0_15 = arith.constant 0 : index
    %32 = vector.load %arg5[%c0_14, %c0_15] : memref<240x1xf32, #tpu.memory_space<vmem>>, vector<240x1xf32>
    tpu.vector_store %arg5[%c0_14, %c0_15], %7 {strides = array<i32>} : memref<240x1xf32, #tpu.memory_space<vmem>>, vector<240x1xf32>,
    %c0_16 = arith.constant 0 : index
    %c0_17 = arith.constant 0 : index
    %33 = vector.load %arg6[%c0_16, %c0_17] : memref<240x1xf32, #tpu.memory_space<vmem>>, vector<240x1xf32>
    tpu.vector_store %arg6[%c0_16, %c0_17], %13 {strides = array<i32>} : memref<240x1xf32, #tpu.memory_space<vmem>>, vector<240x1xf32>,
    return
  }
  func.func @transform_0(%arg0: i32) -> (i32, i32) {
    %c0_i32 = arith.constant 0 : i32
    %c0_i32_0 = arith.constant 0 : i32
    %c0_i32_1 = arith.constant 0 : i32
    return %c0_i32, %c0_i32_0 : i32, i32
  }
  func.func @transform_1(%arg0: i32) -> (i32, i32) {
    %c0_i32 = arith.constant 0 : i32
    %c0_i32_0 = arith.constant 0 : i32
    %c0_i32_1 = arith.constant 0 : i32
    return %c0_i32, %c0_i32_0 : i32, i32
  }
  func.func @transform_2(%arg0: i32) -> (i32, i32) {
    %c0_i32 = arith.constant 0 : i32
    %c0_i32_0 = arith.constant 0 : i32
    %c0_i32_1 = arith.constant 0 : i32
    return %c0_i32, %c0_i32_0 : i32, i32
  }
  func.func @transform_3(%arg0: i32) -> (i32, i32) {
    %c0_i32 = arith.constant 0 : i32
    %c0_i32_0 = arith.constant 0 : i32
    %c0_i32_1 = arith.constant 0 : i32
    return %c0_i32, %c0_i32_0 : i32, i32
  }
  func.func @transform_4(%arg0: i32) -> (i32, i32) {
    %c0_i32 = arith.constant 0 : i32
    %c0_i32_0 = arith.constant 0 : i32
    %c0_i32_1 = arith.constant 0 : i32
    return %c0_i32, %c0_i32_0 : i32, i32
  }
  func.func @transform_5(%arg0: i32) -> (i32, i32) {
    %c0_i32 = arith.constant 0 : i32
    %c0_i32_0 = arith.constant 0 : i32
    %c0_i32_1 = arith.constant 0 : i32
    return %c0_i32, %c0_i32_0 : i32, i32
  }
}

</mosaic_0001>

<llo_original>
// kernel: tpu_custom_call.1
$region0: #{tpu_custom_call.1}
  #allocation0 [shape = 'u32[]', space=smem, size = 0x4, offset = 0x4, fixed_abs, tag = 'smem constant byte address 0x4 - core index']
  #allocation1 [shape = 'u32[144,128]{1,0:T(1,128)}', space=vmem, size = 0x12000, scoped, tag = 'internal scratch']
  %s0 = inlined_call_operand.vmem [shape: f32[240,196], index: 0, kind: input, shape index: {}]
  %s1 = inlined_call_operand.vmem [shape: f32[240,2], index: 1, kind: input, shape index: {}]
  %s2 = inlined_call_operand.vmem [shape: f32[40,240], index: 2, kind: input, shape index: {}]
  %s3 = inlined_call_operand.hbm [shape: f32[40,196], index: 3, kind: output, shape index: {0}]
  %s4 = inlined_call_operand.vmem [shape: f32[240,1], index: 4, kind: output, shape index: {1}]
  %s5 = inlined_call_operand.vmem [shape: f32[240,1], index: 5, kind: output, shape index: {2}]
  %6 = xla_tuple %s3, %s4, %s5
  %s7 = sld [smem:[#allocation0]]
  $region38: #{tpu_custom_call.1} parent=0
    _
  %s9 = ssub.s32 1, %s7
  %s10 = scalar_select 0, %s9, %s7
  $region1: #{tpu_custom_call.1} parent=0
    #allocation2 [shape = 'u8[40960]{0}', space=vmem, size = 0xa000, scoped, tag = 'output window, operand 0, single buffered']
    #allocation3 [shape = 's32[1]{0}', space=sflag, size = 0x4, scoped, tag = 'scoped memory for tpu_custom_call.1']
    %11 = vsyncpa [#allocation3], 0
    // Predicated region
    $region2: #{tpu_custom_call.1} parent=1 // pred_check
      _
    $region3: #{tpu_custom_call.1} parent=1 // pred_check_branch
      %13 = sbr.rel (0) target = $region5
    $region4: #{tpu_custom_call.1} parent=1 // pred_region
      _
    $region5: #{tpu_custom_call.1} parent=1 // pred_fallthru
      _
    // Predicated region
    $region6: #{tpu_custom_call.1} parent=1 // pred_check
      _
    $region7: #{tpu_custom_call.1} parent=1 // pred_check_branch
      %15 = sbr.rel (0) target = $region9
    $region8: #{tpu_custom_call.1} parent=1 // pred_region
      _
    $region9: #{tpu_custom_call.1} parent=1 // pred_fallthru
      _
    // Predicated region
    $region10: #{tpu_custom_call.1} parent=1 // pred_check
      _
    $region11: #{tpu_custom_call.1} parent=1 // pred_check_branch
      %17 = sbr.rel (0) target = $region13
    $region12: #{tpu_custom_call.1} parent=1 // pred_region
      _
    $region13: #{tpu_custom_call.1} parent=1 // pred_fallthru
      _
    %v18 = vld [vmem:[%s0] sm:$0xff]
    %v19 = vld [vmem:[%s0 + $0x8] sm:$0xff]
    %v20 = vld [vmem:[%s0 + $0x10] sm:$0xff]
    %v21 = vld [vmem:[%s0 + $0x18] sm:$0xff]
    %v22 = vld [vmem:[%s0 + $0x20] sm:$0xff]
    %v23 = vld [vmem:[%s0 + $0x28] sm:$0xff]
    %v24 = vld [vmem:[%s0 + $0x30] sm:$0xff]
    %v25 = vld [vmem:[%s0 + $0x38] sm:$0xff]
    %v26 = vld [vmem:[%s0 + $0x40] sm:$0xff]
    %v27 = vld [vmem:[%s0 + $0x48] sm:$0xff]
    %v28 = vld [vmem:[%s0 + $0x50] sm:$0xff]
    %v29 = vld [vmem:[%s0 + $0x58] sm:$0xff]
    %v30 = vld [vmem:[%s0 + $0x60] sm:$0xff]
    %v31 = vld [vmem:[%s0 + $0x68] sm:$0xff]
    %v32 = vld [vmem:[%s0 + $0x70] sm:$0xff]
    %v33 = vld [vmem:[%s0 + $0x78] sm:$0xff]
    %v34 = vld [vmem:[%s0 + $0x80] sm:$0xff]
    %v35 = vld [vmem:[%s0 + $0x88] sm:$0xff]
    %v36 = vld [vmem:[%s0 + $0x90] sm:$0xff]
    %v37 = vld [vmem:[%s0 + $0x98] sm:$0xff]
    %v38 = vld [vmem:[%s0 + $0xa0] sm:$0xff]
    %v39 = vld [vmem:[%s0 + $0xa8] sm:$0xff]
    %v40 = vld [vmem:[%s0 + $0xb0] sm:$0xff]
    %v41 = vld [vmem:[%s0 + $0xb8] sm:$0xff]
    %v42 = vld [vmem:[%s0 + $0xc0] sm:$0xff]
    %v43 = vld [vmem:[%s0 + $0xc8] sm:$0xff]
    %v44 = vld [vmem:[%s0 + $0xd0] sm:$0xff]
    %v45 = vld [vmem:[%s0 + $0xd8] sm:$0xff]
    %v46 = vld [vmem:[%s0 + $0xe0] sm:$0xff]
    %v47 = vld [vmem:[%s0 + $0xe8] sm:$0xff]
    %v48 = vld [vmem:[%s0 + $0xf0] sm:$0xff]
    %v49 = vld [vmem:[%s0 + $0xf8] sm:$0xff]
    %v50 = vld [vmem:[%s0 + $0x100] sm:$0xff]
    %v51 = vld [vmem:[%s0 + $0x108] sm:$0xff]
    %v52 = vld [vmem:[%s0 + $0x110] sm:$0xff]
    %v53 = vld [vmem:[%s0 + $0x118] sm:$0xff]
    %v54 = vld [vmem:[%s0 + $0x120] sm:$0xff]
    %v55 = vld [vmem:[%s0 + $0x128] sm:$0xff]
    %v56 = vld [vmem:[%s0 + $0x130] sm:$0xff]
    %v57 = vld [vmem:[%s0 + $0x138] sm:$0xff]
    %v58 = vld [vmem:[%s0 + $0x140] sm:$0xff]
    %v59 = vld [vmem:[%s0 + $0x148] sm:$0xff]
    %v60 = vld [vmem:[%s0 + $0x150] sm:$0xff]
    %v61 = vld [vmem:[%s0 + $0x158] sm:$0xff]
    %v62 = vld [vmem:[%s0 + $0x160] sm:$0xff]
    %v63 = vld [vmem:[%s0 + $0x168] sm:$0xff]
    %v64 = vld [vmem:[%s0 + $0x170] sm:$0xff]
    %v65 = vld [vmem:[%s0 + $0x178] sm:$0xff]
    %v66 = vld [vmem:[%s0 + $0x180] sm:$0xff]
    %v67 = vld [vmem:[%s0 + $0x188] sm:$0xff]
    %v68 = vld [vmem:[%s0 + $0x190] sm:$0xff]
    %v69 = vld [vmem:[%s0 + $0x198] sm:$0xff]
    %v70 = vld [vmem:[%s0 + $0x1a0] sm:$0xff]
    %v71 = vld [vmem:[%s0 + $0x1a8] sm:$0xff]
    %v72 = vld [vmem:[%s0 + $0x1b0] sm:$0xff]
    %v73 = vld [vmem:[%s0 + $0x1b8] sm:$0xff]
    %v74 = vld [vmem:[%s0 + $0x1c0] sm:$0xff]
    %v75 = vld [vmem:[%s0 + $0x1c8] sm:$0xff]
    %v76 = vld [vmem:[%s0 + $0x1d0] sm:$0xff]
    %v77 = vld [vmem:[%s0 + $0x1d8] sm:$0xff]
    %vm78 = vcmask 556032
    %v79 = vsel %vm78, %v19, 0.0
    %v80 = vadd.f32 %v18, %v79
    %81 = vadd.xlane.f32.xlu0 %v80
    %v82 = vpop.xlane.xlu0 %81
    %v83 = vsel %vm78, %v21, 0.0
    %v84 = vadd.f32 %v20, %v83
    %85 = vadd.xlane.f32.xlu0 %v84
    %v86 = vpop.xlane.xlu0 %85
    %v87 = vsel %vm78, %v23, 0.0
    %v88 = vadd.f32 %v22, %v87
    %89 = vadd.xlane.f32.xlu0 %v88
    %v90 = vpop.xlane.xlu0 %89
    %v91 = vsel %vm78, %v25, 0.0
    %v92 = vadd.f32 %v24, %v91
    %93 = vadd.xlane.f32.xlu0 %v92
    %v94 = vpop.xlane.xlu0 %93
    %v95 = vsel %vm78, %v27, 0.0
    %v96 = vadd.f32 %v26, %v95
    %97 = vadd.xlane.f32.xlu0 %v96
    %v98 = vpop.xlane.xlu0 %97
    %v99 = vsel %vm78, %v29, 0.0
    %v100 = vadd.f32 %v28, %v99
    %101 = vadd.xlane.f32.xlu0 %v100
    %v102 = vpop.xlane.xlu0 %101
    %v103 = vsel %vm78, %v31, 0.0
    %v104 = vadd.f32 %v30, %v103
    %105 = vadd.xlane.f32.xlu0 %v104
    %v106 = vpop.xlane.xlu0 %105
    %v107 = vsel %vm78, %v33, 0.0
    %v108 = vadd.f32 %v32, %v107
    %109 = vadd.xlane.f32.xlu0 %v108
    %v110 = vpop.xlane.xlu0 %109
    %v111 = vsel %vm78, %v35, 0.0
    %v112 = vadd.f32 %v34, %v111
    %113 = vadd.xlane.f32.xlu0 %v112
    %v114 = vpop.xlane.xlu0 %113
    %v115 = vsel %vm78, %v37, 0.0
    %v116 = vadd.f32 %v36, %v115
    %117 = vadd.xlane.f32.xlu0 %v116
    %v118 = vpop.xlane.xlu0 %117
    %v119 = vsel %vm78, %v39, 0.0
    %v120 = vadd.f32 %v38, %v119
    %121 = vadd.xlane.f32.xlu0 %v120
    %v122 = vpop.xlane.xlu0 %121
    %v123 = vsel %vm78, %v41, 0.0
    %v124 = vadd.f32 %v40, %v123
    %125 = vadd.xlane.f32.xlu0 %v124
    %v126 = vpop.xlane.xlu0 %125
    %v127 = vsel %vm78, %v43, 0.0
    %v128 = vadd.f32 %v42, %v127
    %129 = vadd.xlane.f32.xlu0 %v128
    %v130 = vpop.xlane.xlu0 %129
    %v131 = vsel %vm78, %v45, 0.0
    %v132 = vadd.f32 %v44, %v131
    %133 = vadd.xlane.f32.xlu0 %v132
    %v134 = vpop.xlane.xlu0 %133
    %v135 = vsel %vm78, %v47, 0.0
    %v136 = vadd.f32 %v46, %v135
    %137 = vadd.xlane.f32.xlu0 %v136
    %v138 = vpop.xlane.xlu0 %137
    %v139 = vsel %vm78, %v49, 0.0
    %v140 = vadd.f32 %v48, %v139
    %141 = vadd.xlane.f32.xlu0 %v140
    %v142 = vpop.xlane.xlu0 %141
    %v143 = vsel %vm78, %v51, 0.0
    %v144 = vadd.f32 %v50, %v143
    %145 = vadd.xlane.f32.xlu0 %v144
    %v146 = vpop.xlane.xlu0 %145
    %v147 = vsel %vm78, %v53, 0.0
    %v148 = vadd.f32 %v52, %v147
    %149 = vadd.xlane.f32.xlu0 %v148
    %v150 = vpop.xlane.xlu0 %149
    %v151 = vsel %vm78, %v55, 0.0
    %v152 = vadd.f32 %v54, %v151
    %153 = vadd.xlane.f32.xlu0 %v152
    %v154 = vpop.xlane.xlu0 %153
    %v155 = vsel %vm78, %v57, 0.0
    %v156 = vadd.f32 %v56, %v155
    %157 = vadd.xlane.f32.xlu0 %v156
    %v158 = vpop.xlane.xlu0 %157
    %v159 = vsel %vm78, %v59, 0.0
    %v160 = vadd.f32 %v58, %v159
    %161 = vadd.xlane.f32.xlu0 %v160
    %v162 = vpop.xlane.xlu0 %161
    %v163 = vsel %vm78, %v61, 0.0
    %v164 = vadd.f32 %v60, %v163
    %165 = vadd.xlane.f32.xlu0 %v164
    %v166 = vpop.xlane.xlu0 %165
    %v167 = vsel %vm78, %v63, 0.0
    %v168 = vadd.f32 %v62, %v167
    %169 = vadd.xlane.f32.xlu0 %v168
    %v170 = vpop.xlane.xlu0 %169
    %v171 = vsel %vm78, %v65, 0.0
    %v172 = vadd.f32 %v64, %v171
    %173 = vadd.xlane.f32.xlu0 %v172
    %v174 = vpop.xlane.xlu0 %173
    %v175 = vsel %vm78, %v67, 0.0
    %v176 = vadd.f32 %v66, %v175
    %177 = vadd.xlane.f32.xlu0 %v176
    %v178 = vpop.xlane.xlu0 %177
    %v179 = vsel %vm78, %v69, 0.0
    %v180 = vadd.f32 %v68, %v179
    %181 = vadd.xlane.f32.xlu0 %v180
    %v182 = vpop.xlane.xlu0 %181
    %v183 = vsel %vm78, %v71, 0.0
    %v184 = vadd.f32 %v70, %v183
    %185 = vadd.xlane.f32.xlu0 %v184
    %v186 = vpop.xlane.xlu0 %185
    %v187 = vsel %vm78, %v73, 0.0
    %v188 = vadd.f32 %v72, %v187
    %189 = vadd.xlane.f32.xlu0 %v188
    %v190 = vpop.xlane.xlu0 %189
    %v191 = vsel %vm78, %v75, 0.0
    %v192 = vadd.f32 %v74, %v191
    %193 = vadd.xlane.f32.xlu0 %v192
    %v194 = vpop.xlane.xlu0 %193
    %v195 = vsel %vm78, %v77, 0.0
    %v196 = vadd.f32 %v76, %v195
    %197 = vadd.xlane.f32.xlu0 %v196
    %v198 = vpop.xlane.xlu0 %197
    %v199 = vmul.f32 %v18, %v18
    %v200 = vmul.f32 %v19, %v19
    %v201 = vmul.f32 %v20, %v20
    %v202 = vmul.f32 %v21, %v21
    %v203 = vmul.f32 %v22, %v22
    %v204 = vmul.f32 %v23, %v23
    %v205 = vmul.f32 %v24, %v24
    %v206 = vmul.f32 %v25, %v25
    %v207 = vmul.f32 %v26, %v26
    %v208 = vmul.f32 %v27, %v27
    %v209 = vmul.f32 %v28, %v28
    %v210 = vmul.f32 %v29, %v29
    %v211 = vmul.f32 %v30, %v30
    %v212 = vmul.f32 %v31, %v31
    %v213 = vmul.f32 %v32, %v32
    %v214 = vmul.f32 %v33, %v33
    %v215 = vmul.f32 %v34, %v34
    %v216 = vmul.f32 %v35, %v35
    %v217 = vmul.f32 %v36, %v36
    %v218 = vmul.f32 %v37, %v37
    %v219 = vmul.f32 %v38, %v38
    %v220 = vmul.f32 %v39, %v39
    %v221 = vmul.f32 %v40, %v40
    %v222 = vmul.f32 %v41, %v41
    %v223 = vmul.f32 %v42, %v42
    %v224 = vmul.f32 %v43, %v43
    %v225 = vmul.f32 %v44, %v44
    %v226 = vmul.f32 %v45, %v45
    %v227 = vmul.f32 %v46, %v46
    %v228 = vmul.f32 %v47, %v47
    %v229 = vmul.f32 %v48, %v48
    %v230 = vmul.f32 %v49, %v49
    %v231 = vmul.f32 %v50, %v50
    %v232 = vmul.f32 %v51, %v51
    %v233 = vmul.f32 %v52, %v52
    %v234 = vmul.f32 %v53, %v53
    %v235 = vmul.f32 %v54, %v54
    %v236 = vmul.f32 %v55, %v55
    %v237 = vmul.f32 %v56, %v56
    %v238 = vmul.f32 %v57, %v57
    %v239 = vmul.f32 %v58, %v58
    %v240 = vmul.f32 %v59, %v59
    %v241 = vmul.f32 %v60, %v60
    %v242 = vmul.f32 %v61, %v61
    %v243 = vmul.f32 %v62, %v62
    %v244 = vmul.f32 %v63, %v63
    %v245 = vmul.f32 %v64, %v64
    %v246 = vmul.f32 %v65, %v65
    %v247 = vmul.f32 %v66, %v66
    %v248 = vmul.f32 %v67, %v67
    %v249 = vmul.f32 %v68, %v68
    %v250 = vmul.f32 %v69, %v69
    %v251 = vmul.f32 %v70, %v70
    %v252 = vmul.f32 %v71, %v71
    %v253 = vmul.f32 %v72, %v72
    %v254 = vmul.f32 %v73, %v73
    %v255 = vmul.f32 %v74, %v74
    %v256 = vmul.f32 %v75, %v75
    %v257 = vmul.f32 %v76, %v76
    %v258 = vmul.f32 %v77, %v77
    %v259 = vsel %vm78, %v200, 0.0
    %v260 = vadd.f32 %v199, %v259
    %261 = vadd.xlane.f32.xlu0 %v260
    %v262 = vpop.xlane.xlu0 %261
    %v263 = vsel %vm78, %v202, 0.0
    %v264 = vadd.f32 %v201, %v263
    %265 = vadd.xlane.f32.xlu0 %v264
    %v266 = vpop.xlane.xlu0 %265
    %v267 = vsel %vm78, %v204, 0.0
    %v268 = vadd.f32 %v203, %v267
    %269 = vadd.xlane.f32.xlu0 %v268
    %v270 = vpop.xlane.xlu0 %269
    %v271 = vsel %vm78, %v206, 0.0
    %v272 = vadd.f32 %v205, %v271
    %273 = vadd.xlane.f32.xlu0 %v272
    %v274 = vpop.xlane.xlu0 %273
    %v275 = vsel %vm78, %v208, 0.0
    %v276 = vadd.f32 %v207, %v275
    %277 = vadd.xlane.f32.xlu0 %v276
    %v278 = vpop.xlane.xlu0 %277
    %v279 = vsel %vm78, %v210, 0.0
    %v280 = vadd.f32 %v209, %v279
    %281 = vadd.xlane.f32.xlu0 %v280
    %v282 = vpop.xlane.xlu0 %281
    %v283 = vsel %vm78, %v212, 0.0
    %v284 = vadd.f32 %v211, %v283
    %285 = vadd.xlane.f32.xlu0 %v284
    %v286 = vpop.xlane.xlu0 %285
    %v287 = vsel %vm78, %v214, 0.0
    %v288 = vadd.f32 %v213, %v287
    %289 = vadd.xlane.f32.xlu0 %v288
    %v290 = vpop.xlane.xlu0 %289
    %v291 = vsel %vm78, %v216, 0.0
    %v292 = vadd.f32 %v215, %v291
    %293 = vadd.xlane.f32.xlu0 %v292
    %v294 = vpop.xlane.xlu0 %293
    %v295 = vsel %vm78, %v218, 0.0
    %v296 = vadd.f32 %v217, %v295
    %297 = vadd.xlane.f32.xlu0 %v296
    %v298 = vpop.xlane.xlu0 %297
    %v299 = vsel %vm78, %v220, 0.0
    %v300 = vadd.f32 %v219, %v299
    %301 = vadd.xlane.f32.xlu0 %v300
    %v302 = vpop.xlane.xlu0 %301
    %v303 = vsel %vm78, %v222, 0.0
    %v304 = vadd.f32 %v221, %v303
    %305 = vadd.xlane.f32.xlu0 %v304
    %v306 = vpop.xlane.xlu0 %305
    %v307 = vsel %vm78, %v224, 0.0
    %v308 = vadd.f32 %v223, %v307
    %309 = vadd.xlane.f32.xlu0 %v308
    %v310 = vpop.xlane.xlu0 %309
    %v311 = vsel %vm78, %v226, 0.0
    %v312 = vadd.f32 %v225, %v311
    %313 = vadd.xlane.f32.xlu0 %v312
    %v314 = vpop.xlane.xlu0 %313
    %v315 = vsel %vm78, %v228, 0.0
    %v316 = vadd.f32 %v227, %v315
    %317 = vadd.xlane.f32.xlu0 %v316
    %v318 = vpop.xlane.xlu0 %317
    %v319 = vsel %vm78, %v230, 0.0
    %v320 = vadd.f32 %v229, %v319
    %321 = vadd.xlane.f32.xlu0 %v320
    %v322 = vpop.xlane.xlu0 %321
    %v323 = vsel %vm78, %v232, 0.0
    %v324 = vadd.f32 %v231, %v323
    %325 = vadd.xlane.f32.xlu0 %v324
    %v326 = vpop.xlane.xlu0 %325
    %v327 = vsel %vm78, %v234, 0.0
    %v328 = vadd.f32 %v233, %v327
    %329 = vadd.xlane.f32.xlu0 %v328
    %v330 = vpop.xlane.xlu0 %329
    %v331 = vsel %vm78, %v236, 0.0
    %v332 = vadd.f32 %v235, %v331
    %333 = vadd.xlane.f32.xlu0 %v332
    %v334 = vpop.xlane.xlu0 %333
    %v335 = vsel %vm78, %v238, 0.0
    %v336 = vadd.f32 %v237, %v335
    %337 = vadd.xlane.f32.xlu0 %v336
    %v338 = vpop.xlane.xlu0 %337
    %v339 = vsel %vm78, %v240, 0.0
    %v340 = vadd.f32 %v239, %v339
    %341 = vadd.xlane.f32.xlu0 %v340
    %v342 = vpop.xlane.xlu0 %341
    %v343 = vsel %vm78, %v242, 0.0
    %v344 = vadd.f32 %v241, %v343
    %345 = vadd.xlane.f32.xlu0 %v344
    %v346 = vpop.xlane.xlu0 %345
    %v347 = vsel %vm78, %v244, 0.0
    %v348 = vadd.f32 %v243, %v347
    %349 = vadd.xlane.f32.xlu0 %v348
    %v350 = vpop.xlane.xlu0 %349
    %v351 = vsel %vm78, %v246, 0.0
    %v352 = vadd.f32 %v245, %v351
    %353 = vadd.xlane.f32.xlu0 %v352
    %v354 = vpop.xlane.xlu0 %353
    %v355 = vsel %vm78, %v248, 0.0
    %v356 = vadd.f32 %v247, %v355
    %357 = vadd.xlane.f32.xlu0 %v356
    %v358 = vpop.xlane.xlu0 %357
    %v359 = vsel %vm78, %v250, 0.0
    %v360 = vadd.f32 %v249, %v359
    %361 = vadd.xlane.f32.xlu0 %v360
    %v362 = vpop.xlane.xlu0 %361
    %v363 = vsel %vm78, %v252, 0.0
    %v364 = vadd.f32 %v251, %v363
    %365 = vadd.xlane.f32.xlu0 %v364
    %v366 = vpop.xlane.xlu0 %365
    %v367 = vsel %vm78, %v254, 0.0
    %v368 = vadd.f32 %v253, %v367
    %369 = vadd.xlane.f32.xlu0 %v368
    %v370 = vpop.xlane.xlu0 %369
    %v371 = vsel %vm78, %v256, 0.0
    %v372 = vadd.f32 %v255, %v371
    %373 = vadd.xlane.f32.xlu0 %v372
    %v374 = vpop.xlane.xlu0 %373
    %v375 = vsel %vm78, %v258, 0.0
    %v376 = vadd.f32 %v257, %v375
    %377 = vadd.xlane.f32.xlu0 %v376
    %v378 = vpop.xlane.xlu0 %377
    %v379 = vmul.f32 %v82, 0.0051020407
    %v380 = vmul.f32 %v86, 0.0051020407
    %v381 = vmul.f32 %v90, 0.0051020407
    %v382 = vmul.f32 %v94, 0.0051020407
    %v383 = vmul.f32 %v98, 0.0051020407
    %v384 = vmul.f32 %v102, 0.0051020407
    %v385 = vmul.f32 %v106, 0.0051020407
    %v386 = vmul.f32 %v110, 0.0051020407
    %v387 = vmul.f32 %v114, 0.0051020407
    %v388 = vmul.f32 %v118, 0.0051020407
    %v389 = vmul.f32 %v122, 0.0051020407
    %v390 = vmul.f32 %v126, 0.0051020407
    %v391 = vmul.f32 %v130, 0.0051020407
    %v392 = vmul.f32 %v134, 0.0051020407
    %v393 = vmul.f32 %v138, 0.0051020407
    %v394 = vmul.f32 %v142, 0.0051020407
    %v395 = vmul.f32 %v146, 0.0051020407
    %v396 = vmul.f32 %v150, 0.0051020407
    %v397 = vmul.f32 %v154, 0.0051020407
    %v398 = vmul.f32 %v158, 0.0051020407
    %v399 = vmul.f32 %v162, 0.0051020407
    %v400 = vmul.f32 %v166, 0.0051020407
    %v401 = vmul.f32 %v170, 0.0051020407
    %v402 = vmul.f32 %v174, 0.0051020407
    %v403 = vmul.f32 %v178, 0.0051020407
    %v404 = vmul.f32 %v182, 0.0051020407
    %v405 = vmul.f32 %v186, 0.0051020407
    %v406 = vmul.f32 %v190, 0.0051020407
    %v407 = vmul.f32 %v194, 0.0051020407
    %v408 = vmul.f32 %v198, 0.0051020407
    %v409 = vmul.f32 %v262, 0.0051020407
    %v410 = vmul.f32 %v266, 0.0051020407
    %v411 = vmul.f32 %v270, 0.0051020407
    %v412 = vmul.f32 %v274, 0.0051020407
    %v413 = vmul.f32 %v278, 0.0051020407
    %v414 = vmul.f32 %v282, 0.0051020407
    %v415 = vmul.f32 %v286, 0.0051020407
    %v416 = vmul.f32 %v290, 0.0051020407
    %v417 = vmul.f32 %v294, 0.0051020407
    %v418 = vmul.f32 %v298, 0.0051020407
    %v419 = vmul.f32 %v302, 0.0051020407
    %v420 = vmul.f32 %v306, 0.0051020407
    %v421 = vmul.f32 %v310, 0.0051020407
    %v422 = vmul.f32 %v314, 0.0051020407
    %v423 = vmul.f32 %v318, 0.0051020407
    %v424 = vmul.f32 %v322, 0.0051020407
    %v425 = vmul.f32 %v326, 0.0051020407
    %v426 = vmul.f32 %v330, 0.0051020407
    %v427 = vmul.f32 %v334, 0.0051020407
    %v428 = vmul.f32 %v338, 0.0051020407
    %v429 = vmul.f32 %v342, 0.0051020407
    %v430 = vmul.f32 %v346, 0.0051020407
    %v431 = vmul.f32 %v350, 0.0051020407
    %v432 = vmul.f32 %v354, 0.0051020407
    %v433 = vmul.f32 %v358, 0.0051020407
    %v434 = vmul.f32 %v362, 0.0051020407
    %v435 = vmul.f32 %v366, 0.0051020407
    %v436 = vmul.f32 %v370, 0.0051020407
    %v437 = vmul.f32 %v374, 0.0051020407
    %v438 = vmul.f32 %v378, 0.0051020407
    %v439 = vmul.f32 %v379, %v379
    %v440 = vmul.f32 %v380, %v380
    %v441 = vmul.f32 %v381, %v381
    %v442 = vmul.f32 %v382, %v382
    %v443 = vmul.f32 %v383, %v383
    %v444 = vmul.f32 %v384, %v384
    %v445 = vmul.f32 %v385, %v385
    %v446 = vmul.f32 %v386, %v386
    %v447 = vmul.f32 %v387, %v387
    %v448 = vmul.f32 %v388, %v388
    %v449 = vmul.f32 %v389, %v389
    %v450 = vmul.f32 %v390, %v390
    %v451 = vmul.f32 %v391, %v391
    %v452 = vmul.f32 %v392, %v392
    %v453 = vmul.f32 %v393, %v393
    %v454 = vmul.f32 %v394, %v394
    %v455 = vmul.f32 %v395, %v395
    %v456 = vmul.f32 %v396, %v396
    %v457 = vmul.f32 %v397, %v397
    %v458 = vmul.f32 %v398, %v398
    %v459 = vmul.f32 %v399, %v399
    %v460 = vmul.f32 %v400, %v400
    %v461 = vmul.f32 %v401, %v401
    %v462 = vmul.f32 %v402, %v402
    %v463 = vmul.f32 %v403, %v403
    %v464 = vmul.f32 %v404, %v404
    %v465 = vmul.f32 %v405, %v405
    %v466 = vmul.f32 %v406, %v406
    %v467 = vmul.f32 %v407, %v407
    %v468 = vmul.f32 %v408, %v408
    %v469 = vsub.f32 %v409, %v439
    %v470 = vsub.f32 %v410, %v440
    %v471 = vsub.f32 %v411, %v441
    %v472 = vsub.f32 %v412, %v442
    %v473 = vsub.f32 %v413, %v443
    %v474 = vsub.f32 %v414, %v444
    %v475 = vsub.f32 %v415, %v445
    %v476 = vsub.f32 %v416, %v446
    %v477 = vsub.f32 %v417, %v447
    %v478 = vsub.f32 %v418, %v448
    %v479 = vsub.f32 %v419, %v449
    %v480 = vsub.f32 %v420, %v450
    %v481 = vsub.f32 %v421, %v451
    %v482 = vsub.f32 %v422, %v452
    %v483 = vsub.f32 %v423, %v453
    %v484 = vsub.f32 %v424, %v454
    %v485 = vsub.f32 %v425, %v455
    %v486 = vsub.f32 %v426, %v456
    %v487 = vsub.f32 %v427, %v457
    %v488 = vsub.f32 %v428, %v458
    %v489 = vsub.f32 %v429, %v459
    %v490 = vsub.f32 %v430, %v460
    %v491 = vsub.f32 %v431, %v461
    %v492 = vsub.f32 %v432, %v462
    %v493 = vsub.f32 %v433, %v463
    %v494 = vsub.f32 %v434, %v464
    %v495 = vsub.f32 %v435, %v465
    %v496 = vsub.f32 %v436, %v466
    %v497 = vsub.f32 %v437, %v467
    %v498 = vsub.f32 %v438, %v468
    %v499 = vmax.f32 %v469, 0.0
    %v500 = vmax.f32 %v470, 0.0
    %v501 = vmax.f32 %v471, 0.0
    %v502 = vmax.f32 %v472, 0.0
    %v503 = vmax.f32 %v473, 0.0
    %v504 = vmax.f32 %v474, 0.0
    %v505 = vmax.f32 %v475, 0.0
    %v506 = vmax.f32 %v476, 0.0
    %v507 = vmax.f32 %v477, 0.0
    %v508 = vmax.f32 %v478, 0.0
    %v509 = vmax.f32 %v479, 0.0
    %v510 = vmax.f32 %v480, 0.0
    %v511 = vmax.f32 %v481, 0.0
    %v512 = vmax.f32 %v482, 0.0
    %v513 = vmax.f32 %v483, 0.0
    %v514 = vmax.f32 %v484, 0.0
    %v515 = vmax.f32 %v485, 0.0
    %v516 = vmax.f32 %v486, 0.0
    %v517 = vmax.f32 %v487, 0.0
    %v518 = vmax.f32 %v488, 0.0
    %v519 = vmax.f32 %v489, 0.0
    %v520 = vmax.f32 %v490, 0.0
    %v521 = vmax.f32 %v491, 0.0
    %v522 = vmax.f32 %v492, 0.0
    %v523 = vmax.f32 %v493, 0.0
    %v524 = vmax.f32 %v494, 0.0
    %v525 = vmax.f32 %v495, 0.0
    %v526 = vmax.f32 %v496, 0.0
    %v527 = vmax.f32 %v497, 0.0
    %v528 = vmax.f32 %v498, 0.0
    %v529 = vld [vmem:[%s1] sm:$0xff]
    %v530 = vld [vmem:[%s1 + $0x8] sm:$0xff]
    %v531 = vld [vmem:[%s1 + $0x10] sm:$0xff]
    %v532 = vld [vmem:[%s1 + $0x18] sm:$0xff]
    %v533 = vld [vmem:[%s1 + $0x20] sm:$0xff]
    %v534 = vld [vmem:[%s1 + $0x28] sm:$0xff]
    %v535 = vld [vmem:[%s1 + $0x30] sm:$0xff]
    %v536 = vld [vmem:[%s1 + $0x38] sm:$0xff]
    %v537 = vld [vmem:[%s1 + $0x40] sm:$0xff]
    %v538 = vld [vmem:[%s1 + $0x48] sm:$0xff]
    %v539 = vld [vmem:[%s1 + $0x50] sm:$0xff]
    %v540 = vld [vmem:[%s1 + $0x58] sm:$0xff]
    %v541 = vld [vmem:[%s1 + $0x60] sm:$0xff]
    %v542 = vld [vmem:[%s1 + $0x68] sm:$0xff]
    %v543 = vld [vmem:[%s1 + $0x70] sm:$0xff]
    %v544 = vld [vmem:[%s1 + $0x78] sm:$0xff]
    %v545 = vld [vmem:[%s1 + $0x80] sm:$0xff]
    %v546 = vld [vmem:[%s1 + $0x88] sm:$0xff]
    %v547 = vld [vmem:[%s1 + $0x90] sm:$0xff]
    %v548 = vld [vmem:[%s1 + $0x98] sm:$0xff]
    %v549 = vld [vmem:[%s1 + $0xa0] sm:$0xff]
    %v550 = vld [vmem:[%s1 + $0xa8] sm:$0xff]
    %v551 = vld [vmem:[%s1 + $0xb0] sm:$0xff]
    %v552 = vld [vmem:[%s1 + $0xb8] sm:$0xff]
    %v553 = vld [vmem:[%s1 + $0xc0] sm:$0xff]
    %v554 = vld [vmem:[%s1 + $0xc8] sm:$0xff]
    %v555 = vld [vmem:[%s1 + $0xd0] sm:$0xff]
    %v556 = vld [vmem:[%s1 + $0xd8] sm:$0xff]
    %v557 = vld [vmem:[%s1 + $0xe0] sm:$0xff]
    %v558 = vld [vmem:[%s1 + $0xe8] sm:$0xff]
    %v559 = vadd.f32 %v499, 1e-05
    %v560 = vadd.f32 %v500, 1e-05
    %v561 = vadd.f32 %v501, 1e-05
    %v562 = vadd.f32 %v502, 1e-05
    %v563 = vadd.f32 %v503, 1e-05
    %v564 = vadd.f32 %v504, 1e-05
    %v565 = vadd.f32 %v505, 1e-05
    %v566 = vadd.f32 %v506, 1e-05
    %v567 = vadd.f32 %v507, 1e-05
    %v568 = vadd.f32 %v508, 1e-05
    %v569 = vadd.f32 %v509, 1e-05
    %v570 = vadd.f32 %v510, 1e-05
    %v571 = vadd.f32 %v511, 1e-05
    %v572 = vadd.f32 %v512, 1e-05
    %v573 = vadd.f32 %v513, 1e-05
    %v574 = vadd.f32 %v514, 1e-05
    %v575 = vadd.f32 %v515, 1e-05
    %v576 = vadd.f32 %v516, 1e-05
    %v577 = vadd.f32 %v517, 1e-05
    %v578 = vadd.f32 %v518, 1e-05
    %v579 = vadd.f32 %v519, 1e-05
    %v580 = vadd.f32 %v520, 1e-05
    %v581 = vadd.f32 %v521, 1e-05
    %v582 = vadd.f32 %v522, 1e-05
    %v583 = vadd.f32 %v523, 1e-05
    %v584 = vadd.f32 %v524, 1e-05
    %v585 = vadd.f32 %v525, 1e-05
    %v586 = vadd.f32 %v526, 1e-05
    %v587 = vadd.f32 %v527, 1e-05
    %v588 = vadd.f32 %v528, 1e-05
    %v589 = vrsqrt.pop %v559
    %v590 = vrsqrt.pop %v560
    %v591 = vrsqrt.pop %v561
    %v592 = vrsqrt.pop %v562
    %v593 = vrsqrt.pop %v563
    %v594 = vrsqrt.pop %v564
    %v595 = vrsqrt.pop %v565
    %v596 = vrsqrt.pop %v566
    %v597 = vrsqrt.pop %v567
    %v598 = vrsqrt.pop %v568
    %v599 = vrsqrt.pop %v569
    %v600 = vrsqrt.pop %v570
    %v601 = vrsqrt.pop %v571
    %v602 = vrsqrt.pop %v572
    %v603 = vrsqrt.pop %v573
    %v604 = vrsqrt.pop %v574
    %v605 = vrsqrt.pop %v575
    %v606 = vrsqrt.pop %v576
    %v607 = vrsqrt.pop %v577
    %v608 = vrsqrt.pop %v578
    %v609 = vrsqrt.pop %v579
    %v610 = vrsqrt.pop %v580
    %v611 = vrsqrt.pop %v581
    %v612 = vrsqrt.pop %v582
    %v613 = vrsqrt.pop %v583
    %v614 = vrsqrt.pop %v584
    %v615 = vrsqrt.pop %v585
    %v616 = vrsqrt.pop %v586
    %v617 = vrsqrt.pop %v587
    %v618 = vrsqrt.pop %v588
    %v619 = vmul.f32 %v529, %v589
    %v620 = vmul.f32 %v530, %v590
    %v621 = vmul.f32 %v531, %v591
    %v622 = vmul.f32 %v532, %v592
    %v623 = vmul.f32 %v533, %v593
    %v624 = vmul.f32 %v534, %v594
    %v625 = vmul.f32 %v535, %v595
    %v626 = vmul.f32 %v536, %v596
    %v627 = vmul.f32 %v537, %v597
    %v628 = vmul.f32 %v538, %v598
    %v629 = vmul.f32 %v539, %v599
    %v630 = vmul.f32 %v540, %v600
    %v631 = vmul.f32 %v541, %v601
    %v632 = vmul.f32 %v542, %v602
    %v633 = vmul.f32 %v543, %v603
    %v634 = vmul.f32 %v544, %v604
    %v635 = vmul.f32 %v545, %v605
    %v636 = vmul.f32 %v546, %v606
    %v637 = vmul.f32 %v547, %v607
    %v638 = vmul.f32 %v548, %v608
    %v639 = vmul.f32 %v549, %v609
    %v640 = vmul.f32 %v550, %v610
    %v641 = vmul.f32 %v551, %v611
    %v642 = vmul.f32 %v552, %v612
    %v643 = vmul.f32 %v553, %v613
    %v644 = vmul.f32 %v554, %v614
    %v645 = vmul.f32 %v555, %v615
    %v646 = vmul.f32 %v556, %v616
    %v647 = vmul.f32 %v557, %v617
    %v648 = vmul.f32 %v558, %v618
    %v649 = vmul.f32 %v379, %v619
    %v650 = vmul.f32 %v380, %v620
    %v651 = vmul.f32 %v381, %v621
    %v652 = vmul.f32 %v382, %v622
    %v653 = vmul.f32 %v383, %v623
    %v654 = vmul.f32 %v384, %v624
    %v655 = vmul.f32 %v385, %v625
    %v656 = vmul.f32 %v386, %v626
    %v657 = vmul.f32 %v387, %v627
    %v658 = vmul.f32 %v388, %v628
    %v659 = vmul.f32 %v389, %v629
    %v660 = vmul.f32 %v390, %v630
    %v661 = vmul.f32 %v391, %v631
    %v662 = vmul.f32 %v392, %v632
    %v663 = vmul.f32 %v393, %v633
    %v664 = vmul.f32 %v394, %v634
    %v665 = vmul.f32 %v395, %v635
    %v666 = vmul.f32 %v396, %v636
    %v667 = vmul.f32 %v397, %v637
    %v668 = vmul.f32 %v398, %v638
    %v669 = vmul.f32 %v399, %v639
    %v670 = vmul.f32 %v400, %v640
    %v671 = vmul.f32 %v401, %v641
    %v672 = vmul.f32 %v402, %v642
    %v673 = vmul.f32 %v403, %v643
    %v674 = vmul.f32 %v404, %v644
    %v675 = vmul.f32 %v405, %v645
    %v676 = vmul.f32 %v406, %v646
    %v677 = vmul.f32 %v407, %v647
    %v678 = vmul.f32 %v408, %v648
    %709 = vrot.lane.b32.xlu0 %v649, 1
    %v710 = vpop.permute.xlu0 %709
    %711 = vrot.lane.b32.xlu0 %v650, 1
    %v712 = vpop.permute.xlu0 %711
    %713 = vrot.lane.b32.xlu0 %v651, 1
    %v714 = vpop.permute.xlu0 %713
    %715 = vrot.lane.b32.xlu0 %v652, 1
    %v716 = vpop.permute.xlu0 %715
    %717 = vrot.lane.b32.xlu0 %v653, 1
    %v718 = vpop.permute.xlu0 %717
    %719 = vrot.lane.b32.xlu0 %v654, 1
    %v720 = vpop.permute.xlu0 %719
    %721 = vrot.lane.b32.xlu0 %v655, 1
    %v722 = vpop.permute.xlu0 %721
    %723 = vrot.lane.b32.xlu0 %v656, 1
    %v724 = vpop.permute.xlu0 %723
    %725 = vrot.lane.b32.xlu0 %v657, 1
    %v726 = vpop.permute.xlu0 %725
    %727 = vrot.lane.b32.xlu0 %v658, 1
    %v728 = vpop.permute.xlu0 %727
    %729 = vrot.lane.b32.xlu0 %v659, 1
    %v730 = vpop.permute.xlu0 %729
    %731 = vrot.lane.b32.xlu0 %v660, 1
    %v732 = vpop.permute.xlu0 %731
    %733 = vrot.lane.b32.xlu0 %v661, 1
    %v734 = vpop.permute.xlu0 %733
    %735 = vrot.lane.b32.xlu0 %v662, 1
    %v736 = vpop.permute.xlu0 %735
    %737 = vrot.lane.b32.xlu0 %v663, 1
    %v738 = vpop.permute.xlu0 %737
    %739 = vrot.lane.b32.xlu0 %v664, 1
    %v740 = vpop.permute.xlu0 %739
    %741 = vrot.lane.b32.xlu0 %v665, 1
    %v742 = vpop.permute.xlu0 %741
    %743 = vrot.lane.b32.xlu0 %v666, 1
    %v744 = vpop.permute.xlu0 %743
    %745 = vrot.lane.b32.xlu0 %v667, 1
    %v746 = vpop.permute.xlu0 %745
    %747 = vrot.lane.b32.xlu0 %v668, 1
    %v748 = vpop.permute.xlu0 %747
    %749 = vrot.lane.b32.xlu0 %v669, 1
    %v750 = vpop.permute.xlu0 %749
    %751 = vrot.lane.b32.xlu0 %v670, 1
    %v752 = vpop.permute.xlu0 %751
    %753 = vrot.lane.b32.xlu0 %v671, 1
    %v754 = vpop.permute.xlu0 %753
    %755 = vrot.lane.b32.xlu0 %v672, 1
    %v756 = vpop.permute.xlu0 %755
    %757 = vrot.lane.b32.xlu0 %v673, 1
    %v758 = vpop.permute.xlu0 %757
    %759 = vrot.lane.b32.xlu0 %v674, 1
    %v760 = vpop.permute.xlu0 %759
    %761 = vrot.lane.b32.xlu0 %v675, 1
    %v762 = vpop.permute.xlu0 %761
    %763 = vrot.lane.b32.xlu0 %v676, 1
    %v764 = vpop.permute.xlu0 %763
    %765 = vrot.lane.b32.xlu0 %v677, 1
    %v766 = vpop.permute.xlu0 %765
    %767 = vrot.lane.b32.xlu0 %v678, 1
    %v768 = vpop.permute.xlu0 %767
    %v799 = vsub.f32 %v529, %v710
    %v800 = vsub.f32 %v530, %v712
    %v801 = vsub.f32 %v531, %v714
    %v802 = vsub.f32 %v532, %v716
    %v803 = vsub.f32 %v533, %v718
    %v804 = vsub.f32 %v534, %v720
    %v805 = vsub.f32 %v535, %v722
    %v806 = vsub.f32 %v536, %v724
    %v807 = vsub.f32 %v537, %v726
    %v808 = vsub.f32 %v538, %v728
    %v809 = vsub.f32 %v539, %v730
    %v810 = vsub.f32 %v540, %v732
    %v811 = vsub.f32 %v541, %v734
    %v812 = vsub.f32 %v542, %v736
    %v813 = vsub.f32 %v543, %v738
    %v814 = vsub.f32 %v544, %v740
    %v815 = vsub.f32 %v545, %v742
    %v816 = vsub.f32 %v546, %v744
    %v817 = vsub.f32 %v547, %v746
    %v818 = vsub.f32 %v548, %v748
    %v819 = vsub.f32 %v549, %v750
    %v820 = vsub.f32 %v550, %v752
    %v821 = vsub.f32 %v551, %v754
    %v822 = vsub.f32 %v552, %v756
    %v823 = vsub.f32 %v553, %v758
    %v824 = vsub.f32 %v554, %v760
    %v825 = vsub.f32 %v555, %v762
    %v826 = vsub.f32 %v556, %v764
    %v827 = vsub.f32 %v557, %v766
    %v828 = vsub.f32 %v558, %v768
    %830 = vset.pattern.permute.xlu0 0
    %831 = vperm.xlu0 %830, %v619
    %v832 = vpop.permute.xlu0 %831
    %835 = vset.pattern.permute.xlu0 0
    %836 = vperm.xlu0 %835, %v620
    %v837 = vpop.permute.xlu0 %836
    %840 = vset.pattern.permute.xlu0 0
    %841 = vperm.xlu0 %840, %v621
    %v842 = vpop.permute.xlu0 %841
    %845 = vset.pattern.permute.xlu0 0
    %846 = vperm.xlu0 %845, %v622
    %v847 = vpop.permute.xlu0 %846
    %850 = vset.pattern.permute.xlu0 0
    %851 = vperm.xlu0 %850, %v623
    %v852 = vpop.permute.xlu0 %851
    %855 = vset.pattern.permute.xlu0 0
    %856 = vperm.xlu0 %855, %v624
    %v857 = vpop.permute.xlu0 %856
    %860 = vset.pattern.permute.xlu0 0
    %861 = vperm.xlu0 %860, %v625
    %v862 = vpop.permute.xlu0 %861
    %865 = vset.pattern.permute.xlu0 0
    %866 = vperm.xlu0 %865, %v626
    %v867 = vpop.permute.xlu0 %866
    %870 = vset.pattern.permute.xlu0 0
    %871 = vperm.xlu0 %870, %v627
    %v872 = vpop.permute.xlu0 %871
    %875 = vset.pattern.permute.xlu0 0
    %876 = vperm.xlu0 %875, %v628
    %v877 = vpop.permute.xlu0 %876
    %880 = vset.pattern.permute.xlu0 0
    %881 = vperm.xlu0 %880, %v629
    %v882 = vpop.permute.xlu0 %881
    %885 = vset.pattern.permute.xlu0 0
    %886 = vperm.xlu0 %885, %v630
    %v887 = vpop.permute.xlu0 %886
    %890 = vset.pattern.permute.xlu0 0
    %891 = vperm.xlu0 %890, %v631
    %v892 = vpop.permute.xlu0 %891
    %895 = vset.pattern.permute.xlu0 0
    %896 = vperm.xlu0 %895, %v632
    %v897 = vpop.permute.xlu0 %896
    %900 = vset.pattern.permute.xlu0 0
    %901 = vperm.xlu0 %900, %v633
    %v902 = vpop.permute.xlu0 %901
    %905 = vset.pattern.permute.xlu0 0
    %906 = vperm.xlu0 %905, %v634
    %v907 = vpop.permute.xlu0 %906
    %910 = vset.pattern.permute.xlu0 0
    %911 = vperm.xlu0 %910, %v635
    %v912 = vpop.permute.xlu0 %911
    %915 = vset.pattern.permute.xlu0 0
    %916 = vperm.xlu0 %915, %v636
    %v917 = vpop.permute.xlu0 %916
    %920 = vset.pattern.permute.xlu0 0
    %921 = vperm.xlu0 %920, %v637
    %v922 = vpop.permute.xlu0 %921
    %925 = vset.pattern.permute.xlu0 0
    %926 = vperm.xlu0 %925, %v638
    %v927 = vpop.permute.xlu0 %926
    %930 = vset.pattern.permute.xlu0 0
    %931 = vperm.xlu0 %930, %v639
    %v932 = vpop.permute.xlu0 %931
    %935 = vset.pattern.permute.xlu0 0
    %936 = vperm.xlu0 %935, %v640
    %v937 = vpop.permute.xlu0 %936
    %940 = vset.pattern.permute.xlu0 0
    %941 = vperm.xlu0 %940, %v641
    %v942 = vpop.permute.xlu0 %941
    %945 = vset.pattern.permute.xlu0 0
    %946 = vperm.xlu0 %945, %v642
    %v947 = vpop.permute.xlu0 %946
    %950 = vset.pattern.permute.xlu0 0
    %951 = vperm.xlu0 %950, %v643
    %v952 = vpop.permute.xlu0 %951
    %955 = vset.pattern.permute.xlu0 0
    %956 = vperm.xlu0 %955, %v644
    %v957 = vpop.permute.xlu0 %956
    %960 = vset.pattern.permute.xlu0 0
    %961 = vperm.xlu0 %960, %v645
    %v962 = vpop.permute.xlu0 %961
    %965 = vset.pattern.permute.xlu0 0
    %966 = vperm.xlu0 %965, %v646
    %v967 = vpop.permute.xlu0 %966
    %970 = vset.pattern.permute.xlu0 0
    %971 = vperm.xlu0 %970, %v647
    %v972 = vpop.permute.xlu0 %971
    %975 = vset.pattern.permute.xlu0 0
    %976 = vperm.xlu0 %975, %v648
    %v977 = vpop.permute.xlu0 %976
    %v979 = vmul.f32 %v18, %v832
    %v980 = vmul.f32 %v19, %v832
    %v981 = vmul.f32 %v20, %v837
    %v982 = vmul.f32 %v21, %v837
    %v983 = vmul.f32 %v22, %v842
    %v984 = vmul.f32 %v23, %v842
    %v985 = vmul.f32 %v24, %v847
    %v986 = vmul.f32 %v25, %v847
    %v987 = vmul.f32 %v26, %v852
    %v988 = vmul.f32 %v27, %v852
    %v989 = vmul.f32 %v28, %v857
    %v990 = vmul.f32 %v29, %v857
    %v991 = vmul.f32 %v30, %v862
    %v992 = vmul.f32 %v31, %v862
    %v993 = vmul.f32 %v32, %v867
    %v994 = vmul.f32 %v33, %v867
    %v995 = vmul.f32 %v34, %v872
    %v996 = vmul.f32 %v35, %v872
    %v997 = vmul.f32 %v36, %v877
    %v998 = vmul.f32 %v37, %v877
    %v999 = vmul.f32 %v38, %v882
    %v1000 = vmul.f32 %v39, %v882
    %v1001 = vmul.f32 %v40, %v887
    %v1002 = vmul.f32 %v41, %v887
    %v1003 = vmul.f32 %v42, %v892
    %v1004 = vmul.f32 %v43, %v892
    %v1005 = vmul.f32 %v44, %v897
    %v1006 = vmul.f32 %v45, %v897
    %v1007 = vmul.f32 %v46, %v902
    %v1008 = vmul.f32 %v47, %v902
    %v1009 = vmul.f32 %v48, %v907
    %v1010 = vmul.f32 %v49, %v907
    %v1011 = vmul.f32 %v50, %v912
    %v1012 = vmul.f32 %v51, %v912
    %v1013 = vmul.f32 %v52, %v917
    %v1014 = vmul.f32 %v53, %v917
    %v1015 = vmul.f32 %v54, %v922
    %v1016 = vmul.f32 %v55, %v922
    %v1017 = vmul.f32 %v56, %v927
    %v1018 = vmul.f32 %v57, %v927
    %v1019 = vmul.f32 %v58, %v932
    %v1020 = vmul.f32 %v59, %v932
    %v1021 = vmul.f32 %v60, %v937
    %v1022 = vmul.f32 %v61, %v937
    %v1023 = vmul.f32 %v62, %v942
    %v1024 = vmul.f32 %v63, %v942
    %v1025 = vmul.f32 %v64, %v947
    %v1026 = vmul.f32 %v65, %v947
    %v1027 = vmul.f32 %v66, %v952
    %v1028 = vmul.f32 %v67, %v952
    %v1029 = vmul.f32 %v68, %v957
    %v1030 = vmul.f32 %v69, %v957
    %v1031 = vmul.f32 %v70, %v962
    %v1032 = vmul.f32 %v71, %v962
    %v1033 = vmul.f32 %v72, %v967
    %v1034 = vmul.f32 %v73, %v967
    %v1035 = vmul.f32 %v74, %v972
    %v1036 = vmul.f32 %v75, %v972
    %v1037 = vmul.f32 %v76, %v977
    %v1038 = vmul.f32 %v77, %v977
    %1040 = vset.pattern.permute.xlu0 1
    %1041 = vperm.xlu0 %1040, %v799
    %v1042 = vpop.permute.xlu0 %1041
    %1045 = vset.pattern.permute.xlu0 1
    %1046 = vperm.xlu0 %1045, %v800
    %v1047 = vpop.permute.xlu0 %1046
    %1050 = vset.pattern.permute.xlu0 1
    %1051 = vperm.xlu0 %1050, %v801
    %v1052 = vpop.permute.xlu0 %1051
    %1055 = vset.pattern.permute.xlu0 1
    %1056 = vperm.xlu0 %1055, %v802
    %v1057 = vpop.permute.xlu0 %1056
    %1060 = vset.pattern.permute.xlu0 1
    %1061 = vperm.xlu0 %1060, %v803
    %v1062 = vpop.permute.xlu0 %1061
    %1065 = vset.pattern.permute.xlu0 1
    %1066 = vperm.xlu0 %1065, %v804
    %v1067 = vpop.permute.xlu0 %1066
    %1070 = vset.pattern.permute.xlu0 1
    %1071 = vperm.xlu0 %1070, %v805
    %v1072 = vpop.permute.xlu0 %1071
    %1075 = vset.pattern.permute.xlu0 1
    %1076 = vperm.xlu0 %1075, %v806
    %v1077 = vpop.permute.xlu0 %1076
    %1080 = vset.pattern.permute.xlu0 1
    %1081 = vperm.xlu0 %1080, %v807
    %v1082 = vpop.permute.xlu0 %1081
    %1085 = vset.pattern.permute.xlu0 1
    %1086 = vperm.xlu0 %1085, %v808
    %v1087 = vpop.permute.xlu0 %1086
    %1090 = vset.pattern.permute.xlu0 1
    %1091 = vperm.xlu0 %1090, %v809
    %v1092 = vpop.permute.xlu0 %1091
    %1095 = vset.pattern.permute.xlu0 1
    %1096 = vperm.xlu0 %1095, %v810
    %v1097 = vpop.permute.xlu0 %1096
    %1100 = vset.pattern.permute.xlu0 1
    %1101 = vperm.xlu0 %1100, %v811
    %v1102 = vpop.permute.xlu0 %1101
    %1105 = vset.pattern.permute.xlu0 1
    %1106 = vperm.xlu0 %1105, %v812
    %v1107 = vpop.permute.xlu0 %1106
    %1110 = vset.pattern.permute.xlu0 1
    %1111 = vperm.xlu0 %1110, %v813
    %v1112 = vpop.permute.xlu0 %1111
    %1115 = vset.pattern.permute.xlu0 1
    %1116 = vperm.xlu0 %1115, %v814
    %v1117 = vpop.permute.xlu0 %1116
    %1120 = vset.pattern.permute.xlu0 1
    %1121 = vperm.xlu0 %1120, %v815
    %v1122 = vpop.permute.xlu0 %1121
    %1125 = vset.pattern.permute.xlu0 1
    %1126 = vperm.xlu0 %1125, %v816
    %v1127 = vpop.permute.xlu0 %1126
    %1130 = vset.pattern.permute.xlu0 1
    %1131 = vperm.xlu0 %1130, %v817
    %v1132 = vpop.permute.xlu0 %1131
    %1135 = vset.pattern.permute.xlu0 1
    %1136 = vperm.xlu0 %1135, %v818
    %v1137 = vpop.permute.xlu0 %1136
    %1140 = vset.pattern.permute.xlu0 1
    %1141 = vperm.xlu0 %1140, %v819
    %v1142 = vpop.permute.xlu0 %1141
    %1145 = vset.pattern.permute.xlu0 1
    %1146 = vperm.xlu0 %1145, %v820
    %v1147 = vpop.permute.xlu0 %1146
    %1150 = vset.pattern.permute.xlu0 1
    %1151 = vperm.xlu0 %1150, %v821
    %v1152 = vpop.permute.xlu0 %1151
    %1155 = vset.pattern.permute.xlu0 1
    %1156 = vperm.xlu0 %1155, %v822
    %v1157 = vpop.permute.xlu0 %1156
    %1160 = vset.pattern.permute.xlu0 1
    %1161 = vperm.xlu0 %1160, %v823
    %v1162 = vpop.permute.xlu0 %1161
    %1165 = vset.pattern.permute.xlu0 1
    %1166 = vperm.xlu0 %1165, %v824
    %v1167 = vpop.permute.xlu0 %1166
    %1170 = vset.pattern.permute.xlu0 1
    %1171 = vperm.xlu0 %1170, %v825
    %v1172 = vpop.permute.xlu0 %1171
    %1175 = vset.pattern.permute.xlu0 1
    %1176 = vperm.xlu0 %1175, %v826
    %v1177 = vpop.permute.xlu0 %1176
    %1180 = vset.pattern.permute.xlu0 1
    %1181 = vperm.xlu0 %1180, %v827
    %v1182 = vpop.permute.xlu0 %1181
    %1185 = vset.pattern.permute.xlu0 1
    %1186 = vperm.xlu0 %1185, %v828
    %v1187 = vpop.permute.xlu0 %1186
    %v1189 = vadd.f32 %v979, %v1042
    %v1190 = vadd.f32 %v980, %v1042
    %v1191 = vadd.f32 %v981, %v1047
    %v1192 = vadd.f32 %v982, %v1047
    %v1193 = vadd.f32 %v983, %v1052
    %v1194 = vadd.f32 %v984, %v1052
    %v1195 = vadd.f32 %v985, %v1057
    %v1196 = vadd.f32 %v986, %v1057
    %v1197 = vadd.f32 %v987, %v1062
    %v1198 = vadd.f32 %v988, %v1062
    %v1199 = vadd.f32 %v989, %v1067
    %v1200 = vadd.f32 %v990, %v1067
    %v1201 = vadd.f32 %v991, %v1072
    %v1202 = vadd.f32 %v992, %v1072
    %v1203 = vadd.f32 %v993, %v1077
    %v1204 = vadd.f32 %v994, %v1077
    %v1205 = vadd.f32 %v995, %v1082
    %v1206 = vadd.f32 %v996, %v1082
    %v1207 = vadd.f32 %v997, %v1087
    %v1208 = vadd.f32 %v998, %v1087
    %v1209 = vadd.f32 %v999, %v1092
    %v1210 = vadd.f32 %v1000, %v1092
    %v1211 = vadd.f32 %v1001, %v1097
    %v1212 = vadd.f32 %v1002, %v1097
    %v1213 = vadd.f32 %v1003, %v1102
    %v1214 = vadd.f32 %v1004, %v1102
    %v1215 = vadd.f32 %v1005, %v1107
    %v1216 = vadd.f32 %v1006, %v1107
    %v1217 = vadd.f32 %v1007, %v1112
    %v1218 = vadd.f32 %v1008, %v1112
    %v1219 = vadd.f32 %v1009, %v1117
    %v1220 = vadd.f32 %v1010, %v1117
    %v1221 = vadd.f32 %v1011, %v1122
    %v1222 = vadd.f32 %v1012, %v1122
    %v1223 = vadd.f32 %v1013, %v1127
    %v1224 = vadd.f32 %v1014, %v1127
    %v1225 = vadd.f32 %v1015, %v1132
    %v1226 = vadd.f32 %v1016, %v1132
    %v1227 = vadd.f32 %v1017, %v1137
    %v1228 = vadd.f32 %v1018, %v1137
    %v1229 = vadd.f32 %v1019, %v1142
    %v1230 = vadd.f32 %v1020, %v1142
    %v1231 = vadd.f32 %v1021, %v1147
    %v1232 = vadd.f32 %v1022, %v1147
    %v1233 = vadd.f32 %v1023, %v1152
    %v1234 = vadd.f32 %v1024, %v1152
    %v1235 = vadd.f32 %v1025, %v1157
    %v1236 = vadd.f32 %v1026, %v1157
    %v1237 = vadd.f32 %v1027, %v1162
    %v1238 = vadd.f32 %v1028, %v1162
    %v1239 = vadd.f32 %v1029, %v1167
    %v1240 = vadd.f32 %v1030, %v1167
    %v1241 = vadd.f32 %v1031, %v1172
    %v1242 = vadd.f32 %v1032, %v1172
    %v1243 = vadd.f32 %v1033, %v1177
    %v1244 = vadd.f32 %v1034, %v1177
    %v1245 = vadd.f32 %v1035, %v1182
    %v1246 = vadd.f32 %v1036, %v1182
    %v1247 = vadd.f32 %v1037, %v1187
    %v1248 = vadd.f32 %v1038, %v1187
    %v1249 = vmax.f32 %v1189, 0.0
    %v1250 = vmax.f32 %v1190, 0.0
    %v1251 = vmax.f32 %v1191, 0.0
    %v1252 = vmax.f32 %v1192, 0.0
    %v1253 = vmax.f32 %v1193, 0.0
    %v1254 = vmax.f32 %v1194, 0.0
    %v1255 = vmax.f32 %v1195, 0.0
    %v1256 = vmax.f32 %v1196, 0.0
    %v1257 = vmax.f32 %v1197, 0.0
    %v1258 = vmax.f32 %v1198, 0.0
    %v1259 = vmax.f32 %v1199, 0.0
    %v1260 = vmax.f32 %v1200, 0.0
    %v1261 = vmax.f32 %v1201, 0.0
    %v1262 = vmax.f32 %v1202, 0.0
    %v1263 = vmax.f32 %v1203, 0.0
    %v1264 = vmax.f32 %v1204, 0.0
    %v1265 = vmax.f32 %v1205, 0.0
    %v1266 = vmax.f32 %v1206, 0.0
    %v1267 = vmax.f32 %v1207, 0.0
    %v1268 = vmax.f32 %v1208, 0.0
    %v1269 = vmax.f32 %v1209, 0.0
    %v1270 = vmax.f32 %v1210, 0.0
    %v1271 = vmax.f32 %v1211, 0.0
    %v1272 = vmax.f32 %v1212, 0.0
    %v1273 = vmax.f32 %v1213, 0.0
    %v1274 = vmax.f32 %v1214, 0.0
    %v1275 = vmax.f32 %v1215, 0.0
    %v1276 = vmax.f32 %v1216, 0.0
    %v1277 = vmax.f32 %v1217, 0.0
    %v1278 = vmax.f32 %v1218, 0.0
    %v1279 = vmax.f32 %v1219, 0.0
    %v1280 = vmax.f32 %v1220, 0.0
    %v1281 = vmax.f32 %v1221, 0.0
    %v1282 = vmax.f32 %v1222, 0.0
    %v1283 = vmax.f32 %v1223, 0.0
    %v1284 = vmax.f32 %v1224, 0.0
    %v1285 = vmax.f32 %v1225, 0.0
    %v1286 = vmax.f32 %v1226, 0.0
    %v1287 = vmax.f32 %v1227, 0.0
    %v1288 = vmax.f32 %v1228, 0.0
    %v1289 = vmax.f32 %v1229, 0.0
    %v1290 = vmax.f32 %v1230, 0.0
    %v1291 = vmax.f32 %v1231, 0.0
    %v1292 = vmax.f32 %v1232, 0.0
    %v1293 = vmax.f32 %v1233, 0.0
    %v1294 = vmax.f32 %v1234, 0.0
    %v1295 = vmax.f32 %v1235, 0.0
    %v1296 = vmax.f32 %v1236, 0.0
    %v1297 = vmax.f32 %v1237, 0.0
    %v1298 = vmax.f32 %v1238, 0.0
    %v1299 = vmax.f32 %v1239, 0.0
    %v1300 = vmax.f32 %v1240, 0.0
    %v1301 = vmax.f32 %v1241, 0.0
    %v1302 = vmax.f32 %v1242, 0.0
    %v1303 = vmax.f32 %v1243, 0.0
    %v1304 = vmax.f32 %v1244, 0.0
    %v1305 = vmax.f32 %v1245, 0.0
    %v1306 = vmax.f32 %v1246, 0.0
    %v1307 = vmax.f32 %v1247, 0.0
    %v1308 = vmax.f32 %v1248, 0.0
    %v1309 = vld [vmem:[%s2] sm:$0xff]
    %v1310 = vld [vmem:[%s2 + $0x8] sm:$0xff]
    %v1311 = vld [vmem:[%s2 + $0x10] sm:$0xff]
    %v1312 = vld [vmem:[%s2 + $0x18] sm:$0xff]
    %v1313 = vld [vmem:[%s2 + $0x20] sm:$0xff]
    %v1314 = vld [vmem:[%s2 + $0x28] sm:$0xff]
    %v1315 = vld [vmem:[%s2 + $0x30] sm:$0xff]
    %v1316 = vld [vmem:[%s2 + $0x38] sm:$0xff]
    %v1317 = vld [vmem:[%s2 + $0x40] sm:$0xff]
    %v1318 = vld [vmem:[%s2 + $0x48] sm:$0xff]
    %vm1319 = vcmask 916480
    %v1321 = vsel %vm1319, %v1310, 0
    %v1324 = vsel %vm1319, %v1312, 0
    %v1327 = vsel %vm1319, %v1314, 0
    %v1330 = vsel %vm1319, %v1316, 0
    %v1333 = vsel %vm1319, %v1318, 0
    %1335 = vmatprep.subr.mxu0 %v1280
    %1336 = vmatpush1.msra.mxu0 %v1279
    %1337 = vmatprep.subr.mxu0 %v1278
    %1338 = vmatpush1.msra.mxu0 %v1277
    %1339 = vmatprep.subr.mxu0 %v1276
    %1340 = vmatpush1.msra.mxu0 %v1275
    %1341 = vmatprep.subr.mxu0 %v1274
    %1342 = vmatpush1.msra.mxu0 %v1273
    %1343 = vmatprep.subr.mxu0 %v1272
    %1344 = vmatpush1.msra.mxu0 %v1271
    %1345 = vmatprep.subr.mxu0 %v1270
    %1346 = vmatpush1.msra.mxu0 %v1269
    %1347 = vmatprep.subr.mxu0 %v1268
    %1348 = vmatpush1.msra.mxu0 %v1267
    %1349 = vmatprep.subr.mxu0 %v1266
    %1350 = vmatpush1.msra.mxu0 %v1265
    %1351 = vmatprep.subr.mxu0 %v1264
    %1352 = vmatpush1.msra.mxu0 %v1263
    %1353 = vmatprep.subr.mxu0 %v1262
    %1354 = vmatpush1.msra.mxu0 %v1261
    %1355 = vmatprep.subr.mxu0 %v1260
    %1356 = vmatpush1.msra.mxu0 %v1259
    %1357 = vmatprep.subr.mxu0 %v1258
    %1358 = vmatpush1.msra.mxu0 %v1257
    %1359 = vmatprep.subr.mxu0 %v1256
    %1360 = vmatpush1.msra.mxu0 %v1255
    %1361 = vmatprep.subr.mxu0 %v1254
    %1362 = vmatpush1.msra.mxu0 %v1253
    %1363 = vmatprep.subr.mxu0 %v1252
    %1364 = vmatpush1.msra.mxu0 %v1251
    %1365 = vmatprep.subr.mxu0 %v1250
    %1366 = vmatpush1.msra.mxu0 %v1249
    %1367 = vmatprep.subr.mxu0 0.0
    %1368 = vmatpush2.msra.mxu0 0.0
    %1369 = vmatprep.subr.mxu0 0.0
    %1370 = vmatpush2.msra.mxu0 0.0
    %1371 = vmatprep.subr.mxu0 %v1308
    %1372 = vmatpush2.msra.mxu0 %v1307
    %1373 = vmatprep.subr.mxu0 %v1306
    %1374 = vmatpush2.msra.mxu0 %v1305
    %1375 = vmatprep.subr.mxu0 %v1304
    %1376 = vmatpush2.msra.mxu0 %v1303
    %1377 = vmatprep.subr.mxu0 %v1302
    %1378 = vmatpush2.msra.mxu0 %v1301
    %1379 = vmatprep.subr.mxu0 %v1300
    %1380 = vmatpush2.msra.mxu0 %v1299
    %1381 = vmatprep.subr.mxu0 %v1298
    %1382 = vmatpush2.msra.mxu0 %v1297
    %1383 = vmatprep.subr.mxu0 %v1296
    %1384 = vmatpush2.msra.mxu0 %v1295
    %1385 = vmatprep.subr.mxu0 %v1294
    %1386 = vmatpush2.msra.mxu0 %v1293
    %1387 = vmatprep.subr.mxu0 %v1292
    %1388 = vmatpush2.msra.mxu0 %v1291
    %1389 = vmatprep.subr.mxu0 %v1290
    %1390 = vmatpush2.msra.mxu0 %v1289
    %1391 = vmatprep.subr.mxu0 %v1288
    %1392 = vmatpush2.msra.mxu0 %v1287
    %1393 = vmatprep.subr.mxu0 %v1286
    %1394 = vmatpush2.msra.mxu0 %v1285
    %1395 = vmatprep.subr.mxu0 %v1284
    %1396 = vmatpush2.msra.mxu0 %v1283
    %1397 = vmatprep.subr.mxu0 %v1282
    %1398 = vmatpush2.msra.mxu0 %v1281
    %1399 = vmatprep.mubr.f32.mxu0 %v1321
    %1400 = vmatmul.mubr.f32.gmra.mxu0 %v1309
    %v1401 = vpop.f32.mrf.mxu0
    %v1402 = vadd.f32 0.0, %v1401
    %v1403 = vpop.f32.mrf.mxu0
    %v1404 = vadd.f32 0.0, %v1403
    %1405 = vmatprep.mubr.f32.mxu0 %v1324
    %1406 = vmatmul.mubr.f32.gmra.mxu0 %v1311
    %v1407 = vpop.f32.mrf.mxu0
    %v1408 = vadd.f32 0.0, %v1407
    %v1409 = vpop.f32.mrf.mxu0
    %v1410 = vadd.f32 0.0, %v1409
    %1411 = vmatprep.mubr.f32.mxu0 %v1327
    %1412 = vmatmul.mubr.f32.gmra.mxu0 %v1313
    %v1413 = vpop.f32.mrf.mxu0
    %v1414 = vadd.f32 0.0, %v1413
    %v1415 = vpop.f32.mrf.mxu0
    %v1416 = vadd.f32 0.0, %v1415
    %1417 = vmatprep.mubr.f32.mxu0 %v1330
    %1418 = vmatmul.mubr.f32.gmra.mxu0 %v1315
    %v1419 = vpop.f32.mrf.mxu0
    %v1420 = vadd.f32 0.0, %v1419
    %v1421 = vpop.f32.mrf.mxu0
    %v1422 = vadd.f32 0.0, %v1421
    %1423 = vmatprep.mubr.f32.mxu0 %v1333
    %1424 = vmatmul.mubr.f32.gmra.mxu0 %v1317
    %v1425 = vpop.f32.mrf.mxu0
    %v1426 = vadd.f32 0.0, %v1425
    %v1427 = vpop.f32.mrf.mxu0
    %v1428 = vadd.f32 0.0, %v1427
    %1429 = vdwg.mxu0
    %1430 = vst [vmem:[#allocation2] sm:$0xff] %v1402
    %1431 = vst.msk [vmem:[#allocation2 + $0x8] sm:$0xff] %vm78, %v1404
    %1432 = vst [vmem:[#allocation2 + $0x10] sm:$0xff] %v1408
    %1433 = vst.msk [vmem:[#allocation2 + $0x18] sm:$0xff] %vm78, %v1410
    %1434 = vst [vmem:[#allocation2 + $0x20] sm:$0xff] %v1414
    %1435 = vst.msk [vmem:[#allocation2 + $0x28] sm:$0xff] %vm78, %v1416
    %1436 = vst [vmem:[#allocation2 + $0x30] sm:$0xff] %v1420
    %1437 = vst.msk [vmem:[#allocation2 + $0x38] sm:$0xff] %vm78, %v1422
    %1438 = vst [vmem:[#allocation2 + $0x40] sm:$0xff] %v1426
    %1439 = vst.msk [vmem:[#allocation2 + $0x48] sm:$0xff] %vm78, %v1428
    %vm1440 = vcmask 7168
    %1441 = vst.msk [vmem:[%s4] sm:$0xff] %vm1440, %v379
    %1442 = vst.msk [vmem:[%s4 + $0x8] sm:$0xff] %vm1440, %v380
    %1443 = vst.msk [vmem:[%s4 + $0x10] sm:$0xff] %vm1440, %v381
    %1444 = vst.msk [vmem:[%s4 + $0x18] sm:$0xff] %vm1440, %v382
    %1445 = vst.msk [vmem:[%s4 + $0x20] sm:$0xff] %vm1440, %v383
    %1446 = vst.msk [vmem:[%s4 + $0x28] sm:$0xff] %vm1440, %v384
    %1447 = vst.msk [vmem:[%s4 + $0x30] sm:$0xff] %vm1440, %v385
    %1448 = vst.msk [vmem:[%s4 + $0x38] sm:$0xff] %vm1440, %v386
    %1449 = vst.msk [vmem:[%s4 + $0x40] sm:$0xff] %vm1440, %v387
    %1450 = vst.msk [vmem:[%s4 + $0x48] sm:$0xff] %vm1440, %v388
    %1451 = vst.msk [vmem:[%s4 + $0x50] sm:$0xff] %vm1440, %v389
    %1452 = vst.msk [vmem:[%s4 + $0x58] sm:$0xff] %vm1440, %v390
    %1453 = vst.msk [vmem:[%s4 + $0x60] sm:$0xff] %vm1440, %v391
    %1454 = vst.msk [vmem:[%s4 + $0x68] sm:$0xff] %vm1440, %v392
    %1455 = vst.msk [vmem:[%s4 + $0x70] sm:$0xff] %vm1440, %v393
    %1456 = vst.msk [vmem:[%s4 + $0x78] sm:$0xff] %vm1440, %v394
    %1457 = vst.msk [vmem:[%s4 + $0x80] sm:$0xff] %vm1440, %v395
    %1458 = vst.msk [vmem:[%s4 + $0x88] sm:$0xff] %vm1440, %v396
    %1459 = vst.msk [vmem:[%s4 + $0x90] sm:$0xff] %vm1440, %v397
    %1460 = vst.msk [vmem:[%s4 + $0x98] sm:$0xff] %vm1440, %v398
    %1461 = vst.msk [vmem:[%s4 + $0xa0] sm:$0xff] %vm1440, %v399
    %1462 = vst.msk [vmem:[%s4 + $0xa8] sm:$0xff] %vm1440, %v400
    %1463 = vst.msk [vmem:[%s4 + $0xb0] sm:$0xff] %vm1440, %v401
    %1464 = vst.msk [vmem:[%s4 + $0xb8] sm:$0xff] %vm1440, %v402
    %1465 = vst.msk [vmem:[%s4 + $0xc0] sm:$0xff] %vm1440, %v403
    %1466 = vst.msk [vmem:[%s4 + $0xc8] sm:$0xff] %vm1440, %v404
    %1467 = vst.msk [vmem:[%s4 + $0xd0] sm:$0xff] %vm1440, %v405
    %1468 = vst.msk [vmem:[%s4 + $0xd8] sm:$0xff] %vm1440, %v406
    %1469 = vst.msk [vmem:[%s4 + $0xe0] sm:$0xff] %vm1440, %v407
    %1470 = vst.msk [vmem:[%s4 + $0xe8] sm:$0xff] %vm1440, %v408
    %1471 = vst.msk [vmem:[%s5] sm:$0xff] %vm1440, %v499
    %1472 = vst.msk [vmem:[%s5 + $0x8] sm:$0xff] %vm1440, %v500
    %1473 = vst.msk [vmem:[%s5 + $0x10] sm:$0xff] %vm1440, %v501
    %1474 = vst.msk [vmem:[%s5 + $0x18] sm:$0xff] %vm1440, %v502
    %1475 = vst.msk [vmem:[%s5 + $0x20] sm:$0xff] %vm1440, %v503
    %1476 = vst.msk [vmem:[%s5 + $0x28] sm:$0xff] %vm1440, %v504
    %1477 = vst.msk [vmem:[%s5 + $0x30] sm:$0xff] %vm1440, %v505
    %1478 = vst.msk [vmem:[%s5 + $0x38] sm:$0xff] %vm1440, %v506
    %1479 = vst.msk [vmem:[%s5 + $0x40] sm:$0xff] %vm1440, %v507
    %1480 = vst.msk [vmem:[%s5 + $0x48] sm:$0xff] %vm1440, %v508
    %1481 = vst.msk [vmem:[%s5 + $0x50] sm:$0xff] %vm1440, %v509
    %1482 = vst.msk [vmem:[%s5 + $0x58] sm:$0xff] %vm1440, %v510
    %1483 = vst.msk [vmem:[%s5 + $0x60] sm:$0xff] %vm1440, %v511
    %1484 = vst.msk [vmem:[%s5 + $0x68] sm:$0xff] %vm1440, %v512
    %1485 = vst.msk [vmem:[%s5 + $0x70] sm:$0xff] %vm1440, %v513
    %1486 = vst.msk [vmem:[%s5 + $0x78] sm:$0xff] %vm1440, %v514
    %1487 = vst.msk [vmem:[%s5 + $0x80] sm:$0xff] %vm1440, %v515
    %1488 = vst.msk [vmem:[%s5 + $0x88] sm:$0xff] %vm1440, %v516
    %1489 = vst.msk [vmem:[%s5 + $0x90] sm:$0xff] %vm1440, %v517
    %1490 = vst.msk [vmem:[%s5 + $0x98] sm:$0xff] %vm1440, %v518
    %1491 = vst.msk [vmem:[%s5 + $0xa0] sm:$0xff] %vm1440, %v519
    %1492 = vst.msk [vmem:[%s5 + $0xa8] sm:$0xff] %vm1440, %v520
    %1493 = vst.msk [vmem:[%s5 + $0xb0] sm:$0xff] %vm1440, %v521
    %1494 = vst.msk [vmem:[%s5 + $0xb8] sm:$0xff] %vm1440, %v522
    %1495 = vst.msk [vmem:[%s5 + $0xc0] sm:$0xff] %vm1440, %v523
    %1496 = vst.msk [vmem:[%s5 + $0xc8] sm:$0xff] %vm1440, %v524
    %1497 = vst.msk [vmem:[%s5 + $0xd0] sm:$0xff] %vm1440, %v525
    %1498 = vst.msk [vmem:[%s5 + $0xd8] sm:$0xff] %vm1440, %v526
    %1499 = vst.msk [vmem:[%s5 + $0xe0] sm:$0xff] %vm1440, %v527
    %1500 = vst.msk [vmem:[%s5 + $0xe8] sm:$0xff] %vm1440, %v528
    // Predicated region
    $region14: #{tpu_custom_call.1} parent=1 // pred_check
      _
    $region15: #{tpu_custom_call.1} parent=1 // pred_check_branch
      %1502 = sbr.rel (0) target = $region17
    $region16: #{tpu_custom_call.1} parent=1 // pred_region
      %s1504 = ssub.s32 1280, 1280
      %1505 = vsyncadd [#allocation3], %s1504
      %s1506 = sshll.u32 [#allocation2], 4
      %s1507 = int_to_ptr.vmem [resolvable:$true] %s1506
      %1512 = dma.vmem_to_hbm [thread:$0]  %s1507, 1280, %s3, [#allocation3], 256, 256, 16
    $region17: #{tpu_custom_call.1} parent=1 // pred_fallthru
      _
    // Predicated region
    $region18: #{tpu_custom_call.1} parent=1 // pred_check
      _
    $region19: #{tpu_custom_call.1} parent=1 // pred_check_branch
      %1514 = sbr.rel (0) target = $region21
    $region20: #{tpu_custom_call.1} parent=1 // pred_region
      _
    $region21: #{tpu_custom_call.1} parent=1 // pred_fallthru
      _
    // Predicated region
    $region22: #{tpu_custom_call.1} parent=1 // pred_check
      _
    $region23: #{tpu_custom_call.1} parent=1 // pred_check_branch
      %1516 = sbr.rel (0) target = $region25
    $region24: #{tpu_custom_call.1} parent=1 // pred_region
      _
    $region25: #{tpu_custom_call.1} parent=1 // pred_fallthru
      _
    // Predicated region
    $region26: #{tpu_custom_call.1} parent=1 // pred_check
      _
    $region27: #{tpu_custom_call.1} parent=1 // pred_check_branch
      %1518 = sbr.rel (0) target = $region29
    $region28: #{tpu_custom_call.1} parent=1 // pred_region
      %1519 = dma.done [#allocation3], 1280
    $region29: #{tpu_custom_call.1} parent=1 // pred_fallthru
      _
    // Predicated region
    $region30: #{tpu_custom_call.1} parent=1 // pred_check
      _
    $region31: #{tpu_custom_call.1} parent=1 // pred_check_branch
      %1521 = sbr.rel (0) target = $region33
    $region32: #{tpu_custom_call.1} parent=1 // pred_region
      _
    $region33: #{tpu_custom_call.1} parent=1 // pred_fallthru
      _
    // Predicated region
    $region34: #{tpu_custom_call.1} parent=1 // pred_check
      _
    $region35: #{tpu_custom_call.1} parent=1 // pred_check_branch
      %1523 = sbr.rel (0) target = $region37
    $region36: #{tpu_custom_call.1} parent=1 // pred_region
      _
    $region37: #{tpu_custom_call.1} parent=1 // pred_fallthru
      _
    %1524 = vsyncpa [#allocation3], 1

</llo_original>
